<compile_context>
chip_gen: v5e
topology: v5e:2x2
jax: 0.10.0
libtpu: 0.0.40
codegen_flags: <defaults>
</compile_context>

<pallas_src>
import math

import jax
import jax.numpy as jnp
from jax import lax
from jax.experimental import pallas as pl
from jax.experimental.pallas import tpu as pltpu

VAR = 0.01  # std used by the PyTorch init (weight.data.normal_(0, VAR))
_MIB = 1024 * 1024
_CONTRACT_FEATURE = (((1,), (1,)), ((), ()))  # (TN, d) x (out, d) -> (TN, out)


def _md_kernel(x1_ref, x2_ref, x3_ref, w1_ref, w2_ref, w3_ref, b_ref, o_ref):
    # Three MXU matmuls accumulating in f32; weights stay in (out, d) layout.
    z = lax.dot_general(x1_ref[...], w1_ref[...], _CONTRACT_FEATURE,
                        preferred_element_type=jnp.float32)
    z = z + lax.dot_general(x2_ref[...], w2_ref[...], _CONTRACT_FEATURE,
                            preferred_element_type=jnp.float32)
    z = z + lax.dot_general(x3_ref[...], w3_ref[...], _CONTRACT_FEATURE,
                            preferred_element_type=jnp.float32)
    z = z + b_ref[...]                              # VPU broadcast add of (1, out)
    y = jnp.tanh(z).astype(o_ref.dtype)             # EUP
    # Lane-dense store: when o_ref is the reshaped (TN*out/128, 128) slab the
    # row-major reshape folds 128/out rows per store row; otherwise it is a no-op.
    o_ref[...] = y.reshape(o_ref.shape)


def _hw_info():
    """Return (vmem_capacity_bytes, is_v7x_like); robust to query failures."""
    kind = ""
    try:
        kind = jax.devices()[0].device_kind.lower()
    except Exception:
        pass
    is_v7 = "v7" in kind
    try:
        vmem_cap = int(pltpu.get_tpu_info().vmem_capacity_bytes)
    except Exception:
        vmem_cap = (64 if is_v7 else 128) * _MIB
    return vmem_cap, is_v7


def _plan(n, d_total, out_size, vmem_limit_bytes, is_v7, max_rows_per_step):
    """Pick the row tile TN and whether the lane-dense output path is usable."""
    itemsize = 4  # f32
    row_bytes = (d_total + out_size) * itemsize

    # (1) Bandwidth: each grid step should move >= ~2 MiB of HBM traffic so the
    #     ~0.35 us fixed per-step overhead is amortized.
    tn = (2 * _MIB) // row_bytes

    # (2) VMEM: double-buffered input tiles + output tile + resident weights,
    #     all kept under ~half the scoped limit for headroom.
    weight_bytes = 2 * (d_total * out_size + out_size) * itemsize
    budget = max(vmem_limit_bytes // 2 - weight_bytes, 16 * row_bytes)
    tn = min(tn, budget // (2 * row_bytes))

    tn = int(min(max(tn, 8), 8192, n))
    if max_rows_per_step is not None:
        tn = max(1, min(tn, int(max_rows_per_step)))

    # (3) v7x megacore: keep >= 2 grid steps so both TensorCores get rows.
    if is_v7 and tn >= n and n >= 16:
        tn = (n + 1) // 2

    # (4) Lane-dense output feasibility (out_size < 128): the whole output and
    #     every tile boundary must land on 128-element rows of the reshaped slab.
    lane_dense = (out_size < 128) and ((n * out_size) % 128 == 0)

    if tn >= n:
        tn = n  # single step: block shapes equal the full arrays
    else:
        mult = math.lcm(8, 1024 // math.gcd(out_size, 1024)) if lane_dense else 8
        tn = (tn // mult) * mult
        if tn == 0:
            tn = mult
        if tn >= n:
            tn = n
    return tn, lane_dense


def _md_pallas(x1, x2, x3, w1, w2, w3, b2d, tn, lane_dense, vmem_limit):
    n, d1 = x1.shape
    d2 = x2.shape[1]
    d3 = x3.shape[1]
    out = w1.shape[0]
    grid = (pl.cdiv(n, tn),)

    row_spec = lambda d: pl.BlockSpec((tn, d), lambda i: (i, 0))
    const_spec = lambda r, c: pl.BlockSpec((r, c), lambda i: (0, 0))

    if lane_dense:
        out_rows = (n * out) // 128
        blk_rows = (tn * out) // 128
        out_shape = jax.ShapeDtypeStruct((out_rows, 128), x1.dtype)
        out_spec = pl.BlockSpec((blk_rows, 128), lambda i: (i, 0))
    else:
        out_shape = jax.ShapeDtypeStruct((n, out), x1.dtype)
        out_spec = pl.BlockSpec((tn, out), lambda i: (i, 0))

    return pl.pallas_call(
        _md_kernel,
        out_shape=out_shape,
        grid=grid,
        in_specs=[
            row_spec(d1),            # x1 tile
            row_spec(d2),            # x2 tile
            row_spec(d3),            # x3 tile
            const_spec(out, d1),     # W1 (resident, untransposed)
            const_spec(out, d2),     # W2 (resident)
            const_spec(out, d3),     # W3 (resident)
            const_spec(1, out),      # bias (resident)
        ],
        out_specs=out_spec,
        compiler_params=pltpu.CompilerParams(
            dimension_semantics=("parallel",),
            vmem_limit_bytes=int(vmem_limit),
        ),
    )(x1, x2, x3, w1, w2, w3, b2d)


def md_forward(x1, x2, x3, w, b, max_rows_per_step=None):
    """x1:(N,d1) x2:(N,d2) x3:(N,d3); w:(out, d1+d2+d3); b:(out,)."""
    n, d1 = x1.shape
    d2 = x2.shape[1]
    d3 = x3.shape[1]
    out = w.shape[0]
    d_total = d1 + d2 + d3

    # Column-split only (no transpose): the kernel contracts the feature dim of
    # the (out, d_i) blocks directly, so no transposed HBM weight copy per call.
    w1 = w[:, :d1]
    w2 = w[:, d1:d1 + d2]
    w3 = w[:, d1 + d2:]
    b2d = b.reshape(1, out)

    vmem_cap, is_v7 = _hw_info()
    # Generation-aware scoped-VMEM limit: ~96 MiB on 128 MiB chips (v5e/v6e),
    # ~48 MiB on v7x's 64 MiB physical VMEM.
    vmem_limit = min(int(vmem_cap * 3 // 4), 96 * _MIB)

    tn, lane_dense = _plan(n, d_total, out, vmem_limit, is_v7, max_rows_per_step)

    if lane_dense:
        try:
            y = _md_pallas(x1, x2, x3, w1, w2, w3, b2d, tn, True, vmem_limit)
            return y.reshape(n, out)
        except Exception:
            # TODO(synk): lane-dense output path failed to lower on this
            # jax/libtpu combo; fall back to the narrow (tn, out) store.
            pass
    return _md_pallas(x1, x2, x3, w1, w2, w3, b2d, tn, False, vmem_limit)


if __name__ == "__main__":
    # Small shapes consistent with the module: N rows, three feature chunks
    # concatenated to inp_size, linear to out_size.
    N, D1, D2, D3, OUT = 8, 16, 16, 16, 32
    INP = D1 + D2 + D3

    key = jax.random.PRNGKey(0)
    k1, k2, k3, kw = jax.random.split(key, 4)

    x1 = jax.random.normal(k1, (N, D1), dtype=jnp.float32)
    x2 = jax.random.normal(k2, (N, D2), dtype=jnp.float32)
    x3 = jax.random.normal(k3, (N, D3), dtype=jnp.float32)

    # _init_params: weight ~ N(0, std=VAR), bias = 0.
    w = VAR * jax.random.normal(kw, (OUT, INP), dtype=jnp.float32)
    b = jnp.zeros((OUT,), dtype=jnp.float32)

    y = md_forward(x1, x2, x3, w, b)
    jax.block_until_ready(y)

    # Pure-JAX reference matching the PyTorch forward exactly.
    ref = jnp.tanh(jnp.concatenate([x1, x2, x3], axis=1) @ w.T + b)
    assert y.shape == (N, OUT)
    assert jnp.allclose(y, ref, atol=1e-5, rtol=1e-5)

    # Also exercise the multi-step grid / ragged-last-tile / lane-dense path.
    N2 = 100
    kk = jax.random.split(jax.random.PRNGKey(1), 3)
    z1 = jax.random.normal(kk[0], (N2, D1), dtype=jnp.float32)
    z2 = jax.random.normal(kk[1], (N2, D2), dtype=jnp.float32)
    z3 = jax.random.normal(kk[2], (N2, D3), dtype=jnp.float32)
    y2 = md_forward(z1, z2, z3, w, b, max_rows_per_step=32)
    jax.block_until_ready(y2)
    ref2 = jnp.tanh(jnp.concatenate([z1, z2, z3], axis=1) @ w.T + b)
    assert y2.shape == (N2, OUT)
    assert jnp.allclose(y2, ref2, atol=1e-5, rtol=1e-5)

    print("KERNEL_OK")
</pallas_src>

<mosaic_0001>
module attributes {stable_mosaic.version = 11 : i64} {
  func.func @_md_kernel(%arg0: i32, %arg1: memref<8x16xf32, #tpu.memory_space<vmem>>, %arg2: memref<8x16xf32, #tpu.memory_space<vmem>>, %arg3: memref<8x16xf32, #tpu.memory_space<vmem>>, %arg4: memref<32x16xf32, #tpu.memory_space<vmem>>, %arg5: memref<32x16xf32, #tpu.memory_space<vmem>>, %arg6: memref<32x16xf32, #tpu.memory_space<vmem>>, %arg7: memref<1x32xf32, #tpu.memory_space<vmem>>, %arg8: memref<2x128xf32, #tpu.memory_space<vmem>>) attributes {dimension_semantics = [#tpu.dimension_semantics<parallel>], iteration_bounds = array<i64: 1>, scalar_prefetch = 0 : i64, scratch_operands = 0 : i64, tpu.core_type = #tpu.core_type<tc>, window_params = [{transform_indices = @transform_0, window_bounds = array<i64: 8, 16>}, {transform_indices = @transform_1, window_bounds = array<i64: 8, 16>}, {transform_indices = @transform_2, window_bounds = array<i64: 8, 16>}, {pipeline_mode = #tpu.pipeline_mode<synchronous>, transform_indices = @transform_3, window_bounds = array<i64: 32, 16>}, {pipeline_mode = #tpu.pipeline_mode<synchronous>, transform_indices = @transform_4, window_bounds = array<i64: 32, 16>}, {pipeline_mode = #tpu.pipeline_mode<synchronous>, transform_indices = @transform_5, window_bounds = array<i64: 32, 16>}, {pipeline_mode = #tpu.pipeline_mode<synchronous>, transform_indices = @transform_6, window_bounds = array<i64: 1, 32>}, {transform_indices = @transform_7, window_bounds = array<i64: 2, 128>}]} {
    %c0 = arith.constant 0 : index
    %c0_0 = arith.constant 0 : index
    %0 = vector.load %arg1[%c0, %c0_0] : memref<8x16xf32, #tpu.memory_space<vmem>>, vector<8x16xf32>
    %c0_1 = arith.constant 0 : index
    %c0_2 = arith.constant 0 : index
    %1 = vector.load %arg4[%c0_1, %c0_2] : memref<32x16xf32, #tpu.memory_space<vmem>>, vector<32x16xf32>
    %cst = arith.constant dense<0.000000e+00> : vector<8x32xf32>
    %2 = tpu.matmul %0, %1, %cst {dimension_numbers = #tpu.dot_dimension_numbers<[1], [1], [0], [0], [0, 0, 1, 0], [], []>} : vector<8x16xf32>, vector<32x16xf32>, vector<8x32xf32> -> vector<8x32xf32>
    %c0_3 = arith.constant 0 : index
    %c0_4 = arith.constant 0 : index
    %3 = vector.load %arg2[%c0_3, %c0_4] : memref<8x16xf32, #tpu.memory_space<vmem>>, vector<8x16xf32>
    %c0_5 = arith.constant 0 : index
    %c0_6 = arith.constant 0 : index
    %4 = vector.load %arg5[%c0_5, %c0_6] : memref<32x16xf32, #tpu.memory_space<vmem>>, vector<32x16xf32>
    %cst_7 = arith.constant dense<0.000000e+00> : vector<8x32xf32>
    %5 = tpu.matmul %3, %4, %cst_7 {dimension_numbers = #tpu.dot_dimension_numbers<[1], [1], [0], [0], [0, 0, 1, 0], [], []>} : vector<8x16xf32>, vector<32x16xf32>, vector<8x32xf32> -> vector<8x32xf32>
    %6 = arith.addf %2, %5 : vector<8x32xf32>
    %c0_8 = arith.constant 0 : index
    %c0_9 = arith.constant 0 : index
    %7 = vector.load %arg3[%c0_8, %c0_9] : memref<8x16xf32, #tpu.memory_space<vmem>>, vector<8x16xf32>
    %c0_10 = arith.constant 0 : index
    %c0_11 = arith.constant 0 : index
    %8 = vector.load %arg6[%c0_10, %c0_11] : memref<32x16xf32, #tpu.memory_space<vmem>>, vector<32x16xf32>
    %cst_12 = arith.constant dense<0.000000e+00> : vector<8x32xf32>
    %9 = tpu.matmul %7, %8, %cst_12 {dimension_numbers = #tpu.dot_dimension_numbers<[1], [1], [0], [0], [0, 0, 1, 0], [], []>} : vector<8x16xf32>, vector<32x16xf32>, vector<8x32xf32> -> vector<8x32xf32>
    %10 = arith.addf %6, %9 : vector<8x32xf32>
    %c0_13 = arith.constant 0 : index
    %c0_14 = arith.constant 0 : index
    %11 = vector.load %arg7[%c0_13, %c0_14] : memref<1x32xf32, #tpu.memory_space<vmem>>, vector<1x32xf32>
    %12 = vector.broadcast %11 : vector<1x32xf32> to vector<8x32xf32>
    %13 = arith.addf %10, %12 : vector<8x32xf32>
    %14 = math.tanh %13 : vector<8x32xf32>
    %15 = vector.shape_cast %14 : vector<8x32xf32> to vector<2x128xf32>
    %c0_15 = arith.constant 0 : index
    %c0_16 = arith.constant 0 : index
    %16 = vector.load %arg8[%c0_15, %c0_16] : memref<2x128xf32, #tpu.memory_space<vmem>>, vector<2x128xf32>
    tpu.vector_store %arg8[%c0_15, %c0_16], %15 {strides = array<i32>} : memref<2x128xf32, #tpu.memory_space<vmem>>, vector<2x128xf32>,
    return
  }
  func.func @transform_0(%arg0: i32) -> (i32, i32) {
    %c0_i32 = arith.constant 0 : i32
    %c0_i32_0 = arith.constant 0 : i32
    return %arg0, %c0_i32 : i32, i32
  }
  func.func @transform_1(%arg0: i32) -> (i32, i32) {
    %c0_i32 = arith.constant 0 : i32
    %c0_i32_0 = arith.constant 0 : i32
    return %arg0, %c0_i32 : i32, i32
  }
  func.func @transform_2(%arg0: i32) -> (i32, i32) {
    %c0_i32 = arith.constant 0 : i32
    %c0_i32_0 = arith.constant 0 : i32
    return %arg0, %c0_i32 : i32, i32
  }
  func.func @transform_3(%arg0: i32) -> (i32, i32) {
    %c0_i32 = arith.constant 0 : i32
    %c0_i32_0 = arith.constant 0 : i32
    %c0_i32_1 = arith.constant 0 : i32
    return %c0_i32, %c0_i32_0 : i32, i32
  }
  func.func @transform_4(%arg0: i32) -> (i32, i32) {
    %c0_i32 = arith.constant 0 : i32
    %c0_i32_0 = arith.constant 0 : i32
    %c0_i32_1 = arith.constant 0 : i32
    return %c0_i32, %c0_i32_0 : i32, i32
  }
  func.func @transform_5(%arg0: i32) -> (i32, i32) {
    %c0_i32 = arith.constant 0 : i32
    %c0_i32_0 = arith.constant 0 : i32
    %c0_i32_1 = arith.constant 0 : i32
    return %c0_i32, %c0_i32_0 : i32, i32
  }
  func.func @transform_6(%arg0: i32) -> (i32, i32) {
    %c0_i32 = arith.constant 0 : i32
    %c0_i32_0 = arith.constant 0 : i32
    %c0_i32_1 = arith.constant 0 : i32
    return %c0_i32, %c0_i32_0 : i32, i32
  }
  func.func @transform_7(%arg0: i32) -> (i32, i32) {
    %c0_i32 = arith.constant 0 : i32
    %c0_i32_0 = arith.constant 0 : i32
    return %arg0, %c0_i32 : i32, i32
  }
}

module attributes {stable_mosaic.version = 11 : i64} {
  func.func @_md_kernel(%arg0: i32, %arg1: memref<8x16xf32, #tpu.memory_space<vmem>>, %arg2: memref<8x16xf32, #tpu.memory_space<vmem>>, %arg3: memref<8x16xf32, #tpu.memory_space<vmem>>, %arg4: memref<32x16xf32, #tpu.memory_space<vmem>>, %arg5: memref<32x16xf32, #tpu.memory_space<vmem>>, %arg6: memref<32x16xf32, #tpu.memory_space<vmem>>, %arg7: memref<1x32xf32, #tpu.memory_space<vmem>>, %arg8: memref<8x32xf32, #tpu.memory_space<vmem>>) attributes {dimension_semantics = [#tpu.dimension_semantics<parallel>], iteration_bounds = array<i64: 1>, scalar_prefetch = 0 : i64, scratch_operands = 0 : i64, tpu.core_type = #tpu.core_type<tc>, window_params = [{transform_indices = @transform_0, window_bounds = array<i64: 8, 16>}, {transform_indices = @transform_1, window_bounds = array<i64: 8, 16>}, {transform_indices = @transform_2, window_bounds = array<i64: 8, 16>}, {pipeline_mode = #tpu.pipeline_mode<synchronous>, transform_indices = @transform_3, window_bounds = array<i64: 32, 16>}, {pipeline_mode = #tpu.pipeline_mode<synchronous>, transform_indices = @transform_4, window_bounds = array<i64: 32, 16>}, {pipeline_mode = #tpu.pipeline_mode<synchronous>, transform_indices = @transform_5, window_bounds = array<i64: 32, 16>}, {pipeline_mode = #tpu.pipeline_mode<synchronous>, transform_indices = @transform_6, window_bounds = array<i64: 1, 32>}, {transform_indices = @transform_7, window_bounds = array<i64: 8, 32>}]} {
    %c0 = arith.constant 0 : index
    %c0_0 = arith.constant 0 : index
    %0 = vector.load %arg1[%c0, %c0_0] : memref<8x16xf32, #tpu.memory_space<vmem>>, vector<8x16xf32>
    %c0_1 = arith.constant 0 : index
    %c0_2 = arith.constant 0 : index
    %1 = vector.load %arg4[%c0_1, %c0_2] : memref<32x16xf32, #tpu.memory_space<vmem>>, vector<32x16xf32>
    %cst = arith.constant dense<0.000000e+00> : vector<8x32xf32>
    %2 = tpu.matmul %0, %1, %cst {dimension_numbers = #tpu.dot_dimension_numbers<[1], [1], [0], [0], [0, 0, 1, 0], [], []>} : vector<8x16xf32>, vector<32x16xf32>, vector<8x32xf32> -> vector<8x32xf32>
    %c0_3 = arith.constant 0 : index
    %c0_4 = arith.constant 0 : index
    %3 = vector.load %arg2[%c0_3, %c0_4] : memref<8x16xf32, #tpu.memory_space<vmem>>, vector<8x16xf32>
    %c0_5 = arith.constant 0 : index
    %c0_6 = arith.constant 0 : index
    %4 = vector.load %arg5[%c0_5, %c0_6] : memref<32x16xf32, #tpu.memory_space<vmem>>, vector<32x16xf32>
    %cst_7 = arith.constant dense<0.000000e+00> : vector<8x32xf32>
    %5 = tpu.matmul %3, %4, %cst_7 {dimension_numbers = #tpu.dot_dimension_numbers<[1], [1], [0], [0], [0, 0, 1, 0], [], []>} : vector<8x16xf32>, vector<32x16xf32>, vector<8x32xf32> -> vector<8x32xf32>
    %6 = arith.addf %2, %5 : vector<8x32xf32>
    %c0_8 = arith.constant 0 : index
    %c0_9 = arith.constant 0 : index
    %7 = vector.load %arg3[%c0_8, %c0_9] : memref<8x16xf32, #tpu.memory_space<vmem>>, vector<8x16xf32>
    %c0_10 = arith.constant 0 : index
    %c0_11 = arith.constant 0 : index
    %8 = vector.load %arg6[%c0_10, %c0_11] : memref<32x16xf32, #tpu.memory_space<vmem>>, vector<32x16xf32>
    %cst_12 = arith.constant dense<0.000000e+00> : vector<8x32xf32>
    %9 = tpu.matmul %7, %8, %cst_12 {dimension_numbers = #tpu.dot_dimension_numbers<[1], [1], [0], [0], [0, 0, 1, 0], [], []>} : vector<8x16xf32>, vector<32x16xf32>, vector<8x32xf32> -> vector<8x32xf32>
    %10 = arith.addf %6, %9 : vector<8x32xf32>
    %c0_13 = arith.constant 0 : index
    %c0_14 = arith.constant 0 : index
    %11 = vector.load %arg7[%c0_13, %c0_14] : memref<1x32xf32, #tpu.memory_space<vmem>>, vector<1x32xf32>
    %12 = vector.broadcast %11 : vector<1x32xf32> to vector<8x32xf32>
    %13 = arith.addf %10, %12 : vector<8x32xf32>
    %14 = math.tanh %13 : vector<8x32xf32>
    %c0_15 = arith.constant 0 : index
    %c0_16 = arith.constant 0 : index
    %15 = vector.load %arg8[%c0_15, %c0_16] : memref<8x32xf32, #tpu.memory_space<vmem>>, vector<8x32xf32>
    tpu.vector_store %arg8[%c0_15, %c0_16], %14 {strides = array<i32>} : memref<8x32xf32, #tpu.memory_space<vmem>>, vector<8x32xf32>,
    return
  }
  func.func @transform_0(%arg0: i32) -> (i32, i32) {
    %c0_i32 = arith.constant 0 : i32
    %c0_i32_0 = arith.constant 0 : i32
    return %arg0, %c0_i32 : i32, i32
  }
  func.func @transform_1(%arg0: i32) -> (i32, i32) {
    %c0_i32 = arith.constant 0 : i32
    %c0_i32_0 = arith.constant 0 : i32
    return %arg0, %c0_i32 : i32, i32
  }
  func.func @transform_2(%arg0: i32) -> (i32, i32) {
    %c0_i32 = arith.constant 0 : i32
    %c0_i32_0 = arith.constant 0 : i32
    return %arg0, %c0_i32 : i32, i32
  }
  func.func @transform_3(%arg0: i32) -> (i32, i32) {
    %c0_i32 = arith.constant 0 : i32
    %c0_i32_0 = arith.constant 0 : i32
    %c0_i32_1 = arith.constant 0 : i32
    return %c0_i32, %c0_i32_0 : i32, i32
  }
  func.func @transform_4(%arg0: i32) -> (i32, i32) {
    %c0_i32 = arith.constant 0 : i32
    %c0_i32_0 = arith.constant 0 : i32
    %c0_i32_1 = arith.constant 0 : i32
    return %c0_i32, %c0_i32_0 : i32, i32
  }
  func.func @transform_5(%arg0: i32) -> (i32, i32) {
    %c0_i32 = arith.constant 0 : i32
    %c0_i32_0 = arith.constant 0 : i32
    %c0_i32_1 = arith.constant 0 : i32
    return %c0_i32, %c0_i32_0 : i32, i32
  }
  func.func @transform_6(%arg0: i32) -> (i32, i32) {
    %c0_i32 = arith.constant 0 : i32
    %c0_i32_0 = arith.constant 0 : i32
    %c0_i32_1 = arith.constant 0 : i32
    return %c0_i32, %c0_i32_0 : i32, i32
  }
  func.func @transform_7(%arg0: i32) -> (i32, i32) {
    %c0_i32 = arith.constant 0 : i32
    %c0_i32_0 = arith.constant 0 : i32
    return %arg0, %c0_i32 : i32, i32
  }
}

</mosaic_0001>

<llo_original>
// kernel: tpu_custom_call.1
$region0: #{tpu_custom_call.1}
  #allocation0 [shape = 'u32[]', space=smem, size = 0x4, offset = 0x4, fixed_abs, tag = 'smem constant byte address 0x4 - core index']
  #allocation1 [shape = 'u32[72,128]{1,0:T(1,128)}', space=vmem, size = 0x9000, scoped, tag = 'internal scratch']
  %s0 = inlined_call_operand.vmem [shape: f32[8,16], index: 0, kind: input, shape index: {}]
  %s1 = inlined_call_operand.vmem [shape: f32[8,16], index: 1, kind: input, shape index: {}]
  %s2 = inlined_call_operand.vmem [shape: f32[8,16], index: 2, kind: input, shape index: {}]
  %s3 = inlined_call_operand.vmem [shape: f32[32,16], index: 3, kind: input, shape index: {}]
  %s4 = inlined_call_operand.vmem [shape: f32[32,16], index: 4, kind: input, shape index: {}]
  %s5 = inlined_call_operand.vmem [shape: f32[32,16], index: 5, kind: input, shape index: {}]
  %s6 = inlined_call_operand.vmem [shape: f32[1,32], index: 6, kind: input, shape index: {}]
  %s7 = inlined_call_operand.hbm [shape: f32[8,32], index: 7, kind: output, shape index: {}]
  %s8 = sld [smem:[#allocation0]]
  $region38: #{tpu_custom_call.1} parent=0
    _
  %s10 = ssub.s32 1, %s8
  %s11 = scalar_select 0, %s10, %s8
  $region1: #{tpu_custom_call.1} parent=0
    #allocation2 [shape = 'u8[4096]{0}', space=vmem, size = 0x1000, scoped, tag = 'output window, operand 0, single buffered']
    #allocation3 [shape = 's32[1]{0}', space=sflag, size = 0x4, scoped, tag = 'scoped memory for tpu_custom_call.1']
    %12 = vsyncpa [#allocation3], 0
    // Predicated region
    $region2: #{tpu_custom_call.1} parent=1 // pred_check
      _
    $region3: #{tpu_custom_call.1} parent=1 // pred_check_branch
      %14 = sbr.rel (0) target = $region5
    $region4: #{tpu_custom_call.1} parent=1 // pred_region
      _
    $region5: #{tpu_custom_call.1} parent=1 // pred_fallthru
      _
    // Predicated region
    $region6: #{tpu_custom_call.1} parent=1 // pred_check
      _
    $region7: #{tpu_custom_call.1} parent=1 // pred_check_branch
      %16 = sbr.rel (0) target = $region9
    $region8: #{tpu_custom_call.1} parent=1 // pred_region
      _
    $region9: #{tpu_custom_call.1} parent=1 // pred_fallthru
      _
    // Predicated region
    $region10: #{tpu_custom_call.1} parent=1 // pred_check
      _
    $region11: #{tpu_custom_call.1} parent=1 // pred_check_branch
      %18 = sbr.rel (0) target = $region13
    $region12: #{tpu_custom_call.1} parent=1 // pred_region
      _
    $region13: #{tpu_custom_call.1} parent=1 // pred_fallthru
      _
    // Predicated region
    $region14: #{tpu_custom_call.1} parent=1 // pred_check
      _
    $region15: #{tpu_custom_call.1} parent=1 // pred_check_branch
      %20 = sbr.rel (0) target = $region17
    $region16: #{tpu_custom_call.1} parent=1 // pred_region
      _
    $region17: #{tpu_custom_call.1} parent=1 // pred_fallthru
      _
    // Predicated region
    $region18: #{tpu_custom_call.1} parent=1 // pred_check
      _
    $region19: #{tpu_custom_call.1} parent=1 // pred_check_branch
      %22 = sbr.rel (0) target = $region21
    $region20: #{tpu_custom_call.1} parent=1 // pred_region
      _
    $region21: #{tpu_custom_call.1} parent=1 // pred_fallthru
      _
    // Predicated region
    $region22: #{tpu_custom_call.1} parent=1 // pred_check
      _
    $region23: #{tpu_custom_call.1} parent=1 // pred_check_branch
      %24 = sbr.rel (0) target = $region25
    $region24: #{tpu_custom_call.1} parent=1 // pred_region
      _
    $region25: #{tpu_custom_call.1} parent=1 // pred_fallthru
      _
    // Predicated region
    $region26: #{tpu_custom_call.1} parent=1 // pred_check
      _
    $region27: #{tpu_custom_call.1} parent=1 // pred_check_branch
      %26 = sbr.rel (0) target = $region29
    $region28: #{tpu_custom_call.1} parent=1 // pred_region
      _
    $region29: #{tpu_custom_call.1} parent=1 // pred_fallthru
      _
    %v27 = vld [vmem:[%s0] sm:$0xff]
    %v28 = vld [vmem:[%s3] sm:$0xff]
    %v29 = vld [vmem:[%s3 + $0x8] sm:$0xff]
    %v30 = vld [vmem:[%s3 + $0x10] sm:$0xff]
    %v31 = vld [vmem:[%s3 + $0x18] sm:$0xff]
    %v32 = vld [vmem:[%s1] sm:$0xff]
    %v33 = vld [vmem:[%s4] sm:$0xff]
    %v34 = vld [vmem:[%s4 + $0x8] sm:$0xff]
    %v35 = vld [vmem:[%s4 + $0x10] sm:$0xff]
    %v36 = vld [vmem:[%s4 + $0x18] sm:$0xff]
    %vm37 = vcmask 130048
    %v39 = vsel %vm37, %v32, 0
    %v42 = vsel %vm37, %v33, 0
    %v45 = vsel %vm37, %v34, 0
    %v48 = vsel %vm37, %v35, 0
    %v51 = vsel %vm37, %v36, 0
    %53 = vmatpush.xpose.msra.mxu0 0.0
    %54 = vmatpush.xpose.msra.mxu0 0.0
    %55 = vmatpush.xpose.msra.mxu0 0.0
    %56 = vmatpush.xpose.msra.mxu0 0.0
    %57 = vmatpush.xpose.msra.mxu0 0.0
    %58 = vmatpush.xpose.msra.mxu0 0.0
    %59 = vmatpush.xpose.msra.mxu0 0.0
    %60 = vmatpush.xpose.msra.mxu0 0.0
    %61 = vmatpush.xpose.msra.mxu0 0.0
    %62 = vmatpush.xpose.msra.mxu0 0.0
    %63 = vmatpush.xpose.msra.mxu0 0.0
    %64 = vmatpush.xpose.msra.mxu0 0.0
    %65 = vmatpush.xpose.msra.mxu0 %v51
    %66 = vmatpush.xpose.msra.mxu0 %v48
    %67 = vmatpush.xpose.msra.mxu0 %v45
    %68 = vmatpush.xpose.msra.mxu0 %v42
    %69 = vmatmul.f32.gmra.mxu0 %v39
    %v70 = vpop.f32.mrf.mxu0
    %v71 = vadd.f32 0.0, %v70
    %72 = vdwg.mxu0
    %v74 = vsel %vm37, %v27, 0
    %v77 = vsel %vm37, %v28, 0
    %v80 = vsel %vm37, %v29, 0
    %v83 = vsel %vm37, %v30, 0
    %v86 = vsel %vm37, %v31, 0
    %88 = vmatpush.xpose.msra.mxu0 0.0
    %89 = vmatpush.xpose.msra.mxu0 0.0
    %90 = vmatpush.xpose.msra.mxu0 0.0
    %91 = vmatpush.xpose.msra.mxu0 0.0
    %92 = vmatpush.xpose.msra.mxu0 0.0
    %93 = vmatpush.xpose.msra.mxu0 0.0
    %94 = vmatpush.xpose.msra.mxu0 0.0
    %95 = vmatpush.xpose.msra.mxu0 0.0
    %96 = vmatpush.xpose.msra.mxu0 0.0
    %97 = vmatpush.xpose.msra.mxu0 0.0
    %98 = vmatpush.xpose.msra.mxu0 0.0
    %99 = vmatpush.xpose.msra.mxu0 0.0
    %100 = vmatpush.xpose.msra.mxu0 %v86
    %101 = vmatpush.xpose.msra.mxu0 %v83
    %102 = vmatpush.xpose.msra.mxu0 %v80
    %103 = vmatpush.xpose.msra.mxu0 %v77
    %104 = vmatmul.f32.gmra.mxu0 %v74
    %v105 = vpop.f32.mrf.mxu0
    %v106 = vadd.f32 %v71, %v105
    %107 = vdwg.mxu0
    %v108 = vld [vmem:[%s2] sm:$0xff]
    %v109 = vld [vmem:[%s5] sm:$0xff]
    %v110 = vld [vmem:[%s5 + $0x8] sm:$0xff]
    %v111 = vld [vmem:[%s5 + $0x10] sm:$0xff]
    %v112 = vld [vmem:[%s5 + $0x18] sm:$0xff]
    %v114 = vsel %vm37, %v108, 0
    %v117 = vsel %vm37, %v109, 0
    %v120 = vsel %vm37, %v110, 0
    %v123 = vsel %vm37, %v111, 0
    %v126 = vsel %vm37, %v112, 0
    %128 = vmatpush.xpose.msra.mxu0 0.0
    %129 = vmatpush.xpose.msra.mxu0 0.0
    %130 = vmatpush.xpose.msra.mxu0 0.0
    %131 = vmatpush.xpose.msra.mxu0 0.0
    %132 = vmatpush.xpose.msra.mxu0 0.0
    %133 = vmatpush.xpose.msra.mxu0 0.0
    %134 = vmatpush.xpose.msra.mxu0 0.0
    %135 = vmatpush.xpose.msra.mxu0 0.0
    %136 = vmatpush.xpose.msra.mxu0 0.0
    %137 = vmatpush.xpose.msra.mxu0 0.0
    %138 = vmatpush.xpose.msra.mxu0 0.0
    %139 = vmatpush.xpose.msra.mxu0 0.0
    %140 = vmatpush.xpose.msra.mxu0 %v126
    %141 = vmatpush.xpose.msra.mxu0 %v123
    %142 = vmatpush.xpose.msra.mxu0 %v120
    %143 = vmatpush.xpose.msra.mxu0 %v117
    %144 = vmatmul.f32.gmra.mxu0 %v114
    %v145 = vpop.f32.mrf.mxu0
    %v146 = vadd.f32 0.0, %v145
    %147 = vdwg.mxu0
    %v148 = vadd.f32 %v106, %v146
    %v149 = vld [vmem:[%s6] sm:$0x1]
    %v151 = vperm.slane %v149, 0
    %v153 = vadd.f32 %v148, %v151
    %v154 = vtanh.pop %v153
    %vm155 = vcmask 261120
    %156 = vst.msk [vmem:[#allocation2] sm:$0xff] %vm155, %v154
    // Predicated region
    $region30: #{tpu_custom_call.1} parent=1 // pred_check
      _
    $region31: #{tpu_custom_call.1} parent=1 // pred_check_branch
      %158 = sbr.rel (0) target = $region33
    $region32: #{tpu_custom_call.1} parent=1 // pred_region
      %160 = vsyncadd [#allocation3], 0
      %s162 = sshll.u32 [#allocation2], 4
      %s163 = int_to_ptr.vmem [resolvable:$true] %s162
      %s164 = sshll.u32 %s7, 4
      %s165 = int_to_ptr.hbm [resolvable:$true] %s164
      %167 = dma.vmem_to_hbm [thread:$0]  %s163, 128, %s165, [#allocation3]
    $region33: #{tpu_custom_call.1} parent=1 // pred_fallthru
      _
    // Predicated region
    $region34: #{tpu_custom_call.1} parent=1 // pred_check
      _
    $region35: #{tpu_custom_call.1} parent=1 // pred_check_branch
      %169 = sbr.rel (0) target = $region37
    $region36: #{tpu_custom_call.1} parent=1 // pred_region
      %171 = dma.done [#allocation3], 128
    $region37: #{tpu_custom_call.1} parent=1 // pred_fallthru
      _
    %172 = vsyncpa [#allocation3], 1

</llo_original>
